<compile_context>
chip_gen: v5e
topology: v5e:2x2
jax: 0.10.0
libtpu: 0.0.40
codegen_flags: <defaults>
</compile_context>

<pallas_src>
import jax
import jax.numpy as jnp
from jax.experimental import pallas as pl
from jax.experimental.pallas import tpu as pltpu

_LANE = 128           # lane width (last vreg dim)
_ROW_ALIGN = 32       # row-block alignment safe for f32/bf16/int8 sublane packing
_TARGET_TILE_BYTES = 2 * 1024 * 1024  # ~2 MiB per tile (VMEM-safe everywhere)


def _copy_kernel(x_ref, o_ref):
    # Plain tile copy; the kernel is purely HBM-bandwidth bound.
    o_ref[...] = x_ref[...]


def identity(x: jax.Array) -> jax.Array:
    """True identity: return x.  No kernel, no copy, no HBM traffic."""
    return x


def identity_copy(x: jax.Array) -> jax.Array:
    """Materialize a bit-exact copy of x via a tiled, lane-dense Pallas kernel."""
    orig_shape = x.shape
    orig_dtype = x.dtype
    n = x.size
    if n == 0:
        return x

    itemsize = jnp.dtype(orig_dtype).itemsize

    # View the data as a lane-dense (rows, 128) slab.
    rows = pl.cdiv(n, _LANE)
    rows_aligned = ((rows + _ROW_ALIGN - 1) // _ROW_ALIGN) * _ROW_ALIGN

    # Row-block sized for ~2 MiB tiles (multiple of 32 rows).
    target_rows = max(_ROW_ALIGN, _TARGET_TILE_BYTES // (_LANE * itemsize))
    block_rows = min(target_rows, rows_aligned)

    # Pad so the grid divides evenly (keeps every store full-width / unmasked).
    padded_rows = ((rows_aligned + block_rows - 1) // block_rows) * block_rows
    padded_n = padded_rows * _LANE

    flat = x.reshape(-1)
    if padded_n != n:
        flat = jnp.pad(flat, (0, padded_n - n))
    slab = flat.reshape(padded_rows, _LANE)

    out = pl.pallas_call(
        _copy_kernel,
        out_shape=jax.ShapeDtypeStruct((padded_rows, _LANE), orig_dtype),
        grid_spec=pl.GridSpec(
            grid=(padded_rows // block_rows,),
            in_specs=[pl.BlockSpec((block_rows, _LANE), lambda i: (i, 0))],
            out_specs=pl.BlockSpec((block_rows, _LANE), lambda i: (i, 0)),
        ),
        compiler_params=pltpu.CompilerParams(
            dimension_semantics=("parallel",),  # shards copy across TCs on v7x
        ),
    )(slab)

    return out.reshape(-1)[:n].reshape(orig_shape)


class Identity:
    """Mirror of the PyTorch module: forward(x) = x."""

    def __init__(self, d: int):
        self.in_features = d
        self.out_features = d

    def __call__(self, x: jax.Array, *, materialize: bool = False) -> jax.Array:
        # Default (true identity): zero-cost pass-through, per perf review.
        # materialize=True forces an explicit copy through the Pallas kernel.
        if materialize:
            return identity_copy(x)
        return identity(x)


if __name__ == "__main__":
    key = jax.random.PRNGKey(0)
    batch, d = 2, 32
    x = jax.random.normal(key, (batch, d), dtype=jnp.float32)

    layer = Identity(d)

    # Fast path: no kernel, no copy.
    y_fast = layer(x)
    assert y_fast.shape == x.shape and y_fast.dtype == x.dtype
    assert jnp.array_equal(y_fast, x)

    # Pallas copy path: tiled, lane-dense, bit-exact.
    y_kernel = layer(x, materialize=True)
    y_kernel = jax.block_until_ready(y_kernel)
    assert y_kernel.shape == x.shape and y_kernel.dtype == x.dtype
    assert jnp.array_equal(y_kernel, x)

    print("KERNEL_OK")
</pallas_src>

<mosaic_0001>
module attributes {stable_mosaic.version = 11 : i64} {
  func.func @_copy_kernel(%arg0: i32, %arg1: memref<32x128xf32, #tpu.memory_space<vmem>>, %arg2: memref<32x128xf32, #tpu.memory_space<vmem>>) attributes {dimension_semantics = [#tpu.dimension_semantics<parallel>], iteration_bounds = array<i64: 1>, scalar_prefetch = 0 : i64, scratch_operands = 0 : i64, tpu.core_type = #tpu.core_type<tc>, window_params = [{transform_indices = @transform_0, window_bounds = array<i64: 32, 128>}, {transform_indices = @transform_1, window_bounds = array<i64: 32, 128>}]} {
    %c0 = arith.constant 0 : index
    %c0_0 = arith.constant 0 : index
    %0 = vector.load %arg1[%c0, %c0_0] : memref<32x128xf32, #tpu.memory_space<vmem>>, vector<32x128xf32>
    %c0_1 = arith.constant 0 : index
    %c0_2 = arith.constant 0 : index
    %1 = vector.load %arg2[%c0_1, %c0_2] : memref<32x128xf32, #tpu.memory_space<vmem>>, vector<32x128xf32>
    tpu.vector_store %arg2[%c0_1, %c0_2], %0 {strides = array<i32>} : memref<32x128xf32, #tpu.memory_space<vmem>>, vector<32x128xf32>,
    return
  }
  func.func @transform_0(%arg0: i32) -> (i32, i32) {
    %c0_i32 = arith.constant 0 : i32
    %c0_i32_0 = arith.constant 0 : i32
    return %arg0, %c0_i32 : i32, i32
  }
  func.func @transform_1(%arg0: i32) -> (i32, i32) {
    %c0_i32 = arith.constant 0 : i32
    %c0_i32_0 = arith.constant 0 : i32
    return %arg0, %c0_i32 : i32, i32
  }
}

</mosaic_0001>

<llo_original>
// kernel: tpu_custom_call.1
$region0: #{tpu_custom_call.1}
  #allocation0 [shape = 'u32[]', space=smem, size = 0x4, offset = 0x4, fixed_abs, tag = 'smem constant byte address 0x4 - core index']
  #allocation1 [shape = 'u32[72,128]{1,0:T(1,128)}', space=vmem, size = 0x9000, scoped, tag = 'internal scratch']
  %s0 = inlined_call_operand.hbm [shape: f32[32,128], index: 0, kind: input, shape index: {}]
  %s1 = inlined_call_operand.hbm [shape: f32[32,128], index: 1, kind: output, shape index: {}]
  %s2 = sld [smem:[#allocation0]]
  $region18: #{tpu_custom_call.1} parent=0
    _
  %s4 = ssub.s32 1, %s2
  %s5 = scalar_select 0, %s4, %s2
  $region1: #{tpu_custom_call.1} parent=0
    #allocation2 [shape = 'u8[16384]{0}', space=vmem, size = 0x4000, scoped, tag = 'input window, operand 0, single buffered']
    #allocation3 [shape = 's32[1]{0}', space=sflag, size = 0x4, scoped, tag = 'scoped memory for tpu_custom_call.1']
    #allocation4 [shape = 's32[1]{0}', space=sflag, size = 0x4, scoped, tag = 'scoped memory for tpu_custom_call.1']
    #allocation5 [shape = 'u8[16384]{0}', space=vmem, size = 0x4000, scoped, tag = 'output window, operand 0, single buffered']
    %6 = vsyncpa [#allocation3], 0
    %7 = vsyncpa [#allocation4], 0
    // Predicated region
    $region2: #{tpu_custom_call.1} parent=1 // pred_check
      _
    $region3: #{tpu_custom_call.1} parent=1 // pred_check_branch
      %9 = sbr.rel (0) target = $region5
    $region4: #{tpu_custom_call.1} parent=1 // pred_region
      %11 = vsyncadd [#allocation3], 0
      %s12 = sshll.u32 %s0, 4
      %s13 = int_to_ptr.hbm [resolvable:$true] %s12
      %s14 = sshll.u32 [#allocation2], 4
      %s15 = int_to_ptr.vmem [resolvable:$true] %s14
      %20 = dma.hbm_to_vmem [thread:$0]  %s13, 512, %s15, [#allocation3], 128, 128, 8
    $region5: #{tpu_custom_call.1} parent=1 // pred_fallthru
      _
    // Predicated region
    $region6: #{tpu_custom_call.1} parent=1 // pred_check
      _
    $region7: #{tpu_custom_call.1} parent=1 // pred_check_branch
      %22 = sbr.rel (0) target = $region9
    $region8: #{tpu_custom_call.1} parent=1 // pred_region
      %24 = dma.done [#allocation3], 512
    $region9: #{tpu_custom_call.1} parent=1 // pred_fallthru
      _
    %v25 = vld [vmem:[#allocation2] sm:$0xff]
    %v26 = vld [vmem:[#allocation2 + $0x8] sm:$0xff]
    %v27 = vld [vmem:[#allocation2 + $0x10] sm:$0xff]
    %v28 = vld [vmem:[#allocation2 + $0x18] sm:$0xff]
    %29 = vst [vmem:[#allocation5] sm:$0xff] %v25
    %30 = vst [vmem:[#allocation5 + $0x8] sm:$0xff] %v26
    %31 = vst [vmem:[#allocation5 + $0x10] sm:$0xff] %v27
    %32 = vst [vmem:[#allocation5 + $0x18] sm:$0xff] %v28
    // Predicated region
    $region10: #{tpu_custom_call.1} parent=1 // pred_check
      _
    $region11: #{tpu_custom_call.1} parent=1 // pred_check_branch
      %34 = sbr.rel (0) target = $region13
    $region12: #{tpu_custom_call.1} parent=1 // pred_region
      %36 = vsyncadd [#allocation4], 0
      %s37 = sshll.u32 [#allocation5], 4
      %s38 = int_to_ptr.vmem [resolvable:$true] %s37
      %s39 = sshll.u32 %s1, 4
      %s40 = int_to_ptr.hbm [resolvable:$true] %s39
      %45 = dma.vmem_to_hbm [thread:$0]  %s38, 512, %s40, [#allocation4], 128, 128, 8
    $region13: #{tpu_custom_call.1} parent=1 // pred_fallthru
      _
    // Predicated region
    $region14: #{tpu_custom_call.1} parent=1 // pred_check
      _
    $region15: #{tpu_custom_call.1} parent=1 // pred_check_branch
      %47 = sbr.rel (0) target = $region17
    $region16: #{tpu_custom_call.1} parent=1 // pred_region
      %49 = dma.done [#allocation4], 512
    $region17: #{tpu_custom_call.1} parent=1 // pred_fallthru
      _
    %50 = vsyncpa [#allocation3], 1
    %51 = vsyncpa [#allocation4], 1

</llo_original>
